<compile_context>
chip_gen: v7x
topology: tpu7x:2x2x1
jax: 0.10.0
libtpu: 0.0.40
codegen_flags: <defaults>
</compile_context>

<pallas_src>
import functools
import math

import jax
import jax.numpy as jnp
import numpy as np
from jax.experimental import pallas as pl
from jax.experimental.pallas import tpu as pltpu

_ROW_GRAN = 32        # folded-row granularity (multiple of 32 sublanes: safe for f32/bf16/fp8)
_MAX_TILE_ROWS = 2048  # cap on folded rows per grid step


def _round_up(x, m):
    return ((x + m - 1) // m) * m


def _rope_cache_kernel(w_ref, g_ref, cos_ref, sin_ref, *, pack, half):
    """One grid step: TILE_R folded rows of the cos/sin cache.

    Folded layout: folded row i packs `pack` consecutive positions; output lane
    o (< pack*dim) holds position i*pack + o//dim at rotary index o%dim.

    w_ref: (1, pack*half) f32 — inv_freq[lane % half]      (VMEM-resident)
    g_ref: (1, pack*half) f32 — float(lane // half)         (VMEM-resident)
    cos_ref/sin_ref: (TILE_R, pack*dim) output tiles in the model dtype.
    """
    tile_r = cos_ref.shape[0]
    cw = w_ref.shape[1]                                   # pack * half
    row0 = pl.program_id(0) * tile_r
    r_iota = jax.lax.broadcasted_iota(jnp.int32, (tile_r, cw), 0)
    # Position of lane-group 0 in each folded row (exact in f32 for p < 2**24).
    base = ((row0 + r_iota) * pack).astype(jnp.float32)
    # angle[r, l] = (base + l//half) * inv_freq[l % half]; the sum of two
    # integer-valued f32s is exact, so the product rounds like the reference.
    angles = (base + g_ref[...]) * w_ref[...]             # (TILE_R, pack*half), lane-dense
    c = jnp.cos(angles)                                   # each distinct angle evaluated
    s = jnp.sin(angles)                                   # exactly once on the EUP
    # emb = cat([freqs, freqs], -1): duplicate each half-block along lanes
    # (cheap lane copies under the EUP work) and store full-width, lane-dense.
    cpieces, spieces = [], []
    for g in range(pack):
        cg = c[:, g * half:(g + 1) * half]
        sg = s[:, g * half:(g + 1) * half]
        cpieces += [cg, cg]
        spieces += [sg, sg]
    cos_ref[...] = jnp.concatenate(cpieces, axis=-1).astype(cos_ref.dtype)
    sin_ref[...] = jnp.concatenate(spieces, axis=-1).astype(sin_ref.dtype)


@functools.partial(
    jax.jit, static_argnames=("folded_rows", "tile_rows", "half", "pack", "out_dtype"))
def _build_cache(w_row, g_row, *, folded_rows, tile_rows, half, pack, out_dtype):
    """Build the full cos/sin cache; returns (cache_len, dim) arrays in out_dtype."""
    dim = 2 * half
    ow = pack * dim
    cw = pack * half
    out_sd = jax.ShapeDtypeStruct((folded_rows, ow), out_dtype)
    kernel = functools.partial(_rope_cache_kernel, pack=pack, half=half)
    cos_f, sin_f = pl.pallas_call(
        kernel,
        out_shape=(out_sd, out_sd),
        grid_spec=pl.GridSpec(
            grid=(folded_rows // tile_rows,),
            in_specs=[
                # Tiny constant-index blocks -> stay resident, no per-tile DMA.
                pl.BlockSpec((1, cw), lambda i: (0, 0)),
                pl.BlockSpec((1, cw), lambda i: (0, 0)),
            ],
            out_specs=[
                pl.BlockSpec((tile_rows, ow), lambda i: (i, 0)),
                pl.BlockSpec((tile_rows, ow), lambda i: (i, 0)),
            ],
        ),
        compiler_params=pltpu.CompilerParams(
            dimension_semantics=("parallel",),   # shard tiles across v7x's 2 TCs
        ),
    )(w_row, g_row)
    cache_len = folded_rows * pack
    # Row-major unfold: (F, pack*dim) -> (F*pack, dim); a one-time op at build.
    return cos_f.reshape(cache_len, dim), sin_f.reshape(cache_len, dim)


class Qwen2RotaryEmbeddingPallas:
    """JAX/Pallas port of Qwen2RotaryEmbedding (forward pass only)."""

    def __init__(self, dim, max_position_embeddings=2048, base=10000.0,
                 dtype=jnp.float32):
        assert dim % 2 == 0, "rotary dim must be even"
        self.dim = int(dim)
        self.half = self.dim // 2
        self.max_position_embeddings = int(max_position_embeddings)
        self.base = float(base)
        # Positions packed per stored row so both the transcendental block and
        # the output stores are lane-dense (widths are multiples of 128).
        self.pack = max(1, math.lcm(self.half, 128) // self.half)
        # inv_freq = 1 / base ** (arange(0, dim, 2) / dim)   (f32, like PyTorch)
        inv_freq = 1.0 / (self.base ** (
            jnp.arange(0, self.dim, 2, dtype=jnp.float32) / self.dim))
        self.inv_freq = inv_freq                                      # (half,)
        # Per-lane tables for the packed compute block (tiny, VMEM-resident).
        self._w_row = jnp.tile(inv_freq, self.pack)[None, :]          # inv_freq[l % half]
        self._g_row = jnp.repeat(jnp.arange(self.pack, dtype=jnp.float32),
                                 self.half)[None, :]                  # float(l // half)
        self._full = {}      # dtype -> (cos_full, sin_full)   dtype-native caches
        self._sliced = {}    # (seq_len, dtype) -> (cos, sin)  per-call memo
        self.max_seq_len_cached = 0
        self._folded_rows = 0
        self._tile_rows = 0
        self._set_cos_sin_cache(self.max_position_embeddings, np.dtype(dtype))

    # -- geometry -------------------------------------------------------------
    def _choose_tiling(self, seq_len):
        need = _round_up(max(-(-seq_len // self.pack), 1), _ROW_GRAN)
        # >= ~512 positions per tile (amortize ~0.35us/step) and >= 4 tiles
        # when the cache is big enough (2 tiles per v7x TensorCore).
        min_tile = _round_up(max(_ROW_GRAN, -(-512 // self.pack)), _ROW_GRAN)
        quarter = _round_up(max(need // 4, 1), _ROW_GRAN)
        tile = min(max(min_tile, quarter), _MAX_TILE_ROWS)
        if tile > need:
            tile = need
        return tile, _round_up(need, tile)

    def _set_cos_sin_cache(self, seq_len, dtype):
        tile, folded = self._choose_tiling(int(seq_len))
        self._tile_rows = tile
        self._folded_rows = folded
        self.max_seq_len_cached = folded * self.pack
        self._full = {}
        self._sliced = {}
        self._full[np.dtype(dtype)] = self._build(np.dtype(dtype))

    def _build(self, dtype):
        return _build_cache(self._w_row, self._g_row,
                            folded_rows=self._folded_rows,
                            tile_rows=self._tile_rows,
                            half=self.half, pack=self.pack,
                            out_dtype=np.dtype(dtype))

    def _get_full(self, dtype):
        full = self._full.get(dtype)
        if full is None:
            full = self._build(dtype)
            self._full[dtype] = full
        return full

    # -- forward --------------------------------------------------------------
    def __call__(self, x, seq_len=None):
        if seq_len is None:
            seq_len = x.shape[-2]        # PyTorch infers it from x
        seq_len = int(seq_len)
        dtype = np.dtype(x.dtype)
        if seq_len > self.max_seq_len_cached:
            self._set_cos_sin_cache(seq_len, dtype)
        key = (seq_len, dtype)
        out = self._sliced.get(key)
        if out is None:
            cos_full, sin_full = self._get_full(dtype)
            out = (cos_full[:seq_len], sin_full[:seq_len])
            self._sliced[key] = out
        return out


def _reference(dim, base, seq_len, dtype):
    inv_freq = 1.0 / (base ** (jnp.arange(0, dim, 2, dtype=jnp.float32) / dim))
    t = jnp.arange(seq_len, dtype=jnp.float32)
    freqs = jnp.outer(t, inv_freq)
    emb = jnp.concatenate([freqs, freqs], axis=-1)
    return jnp.cos(emb).astype(dtype), jnp.sin(emb).astype(dtype)


if __name__ == "__main__":
    key = jax.random.PRNGKey(0)
    batch, seq, hidden = 2, 8, 32
    dim = hidden  # per-head dim for the rotary embedding
    x = jax.random.normal(key, (batch, seq, hidden), dtype=jnp.float32)

    rope = Qwen2RotaryEmbeddingPallas(dim=dim, max_position_embeddings=64, base=10000)

    # 1) small shape, dim=32 (pack=8 folded lane-dense path), from the init cache
    cos, sin = rope(x, seq_len=seq)
    jax.block_until_ready((cos, sin))
    cos_ref, sin_ref = _reference(dim, 10000.0, seq, x.dtype)
    assert cos.shape == (seq, dim) and sin.shape == (seq, dim)
    assert cos.dtype == x.dtype and sin.dtype == x.dtype
    assert jnp.allclose(cos, cos_ref, atol=1e-5, rtol=1e-5)
    assert jnp.allclose(sin, sin_ref, atol=1e-5, rtol=1e-5)

    # 2) bf16 input -> dtype-native cache build + memoized per-call result
    xb = x.astype(jnp.bfloat16)
    cos_b, sin_b = rope(xb, seq_len=seq)
    jax.block_until_ready((cos_b, sin_b))
    assert cos_b.dtype == jnp.bfloat16 and sin_b.dtype == jnp.bfloat16
    assert jnp.allclose(cos_b.astype(jnp.float32), cos_ref, atol=1e-2, rtol=1e-2)
    assert jnp.allclose(sin_b.astype(jnp.float32), sin_ref, atol=1e-2, rtol=1e-2)
    assert rope(xb, seq_len=seq)[0] is cos_b   # memo hit: no slice/convert launch

    # 3) longer seq_len -> cache rebuild, multi-tile (grid>1) parallel path
    long_seq = 2048
    cos_l, sin_l = rope(x, seq_len=long_seq)
    jax.block_until_ready((cos_l, sin_l))
    cos_lr, sin_lr = _reference(dim, 10000.0, long_seq, x.dtype)
    assert cos_l.shape == (long_seq, dim) and sin_l.shape == (long_seq, dim)
    assert jnp.allclose(cos_l, cos_lr, atol=1e-4, rtol=1e-5)
    assert jnp.allclose(sin_l, sin_lr, atol=1e-4, rtol=1e-5)

    # 4) real Qwen2 head_dim=128 (pack=2 path), seq_len inferred from x
    rope128 = Qwen2RotaryEmbeddingPallas(dim=128, max_position_embeddings=32, base=10000)
    x128 = jax.random.normal(key, (1, 16, 128), dtype=jnp.float32)
    cos_h, sin_h = rope128(x128)
    jax.block_until_ready((cos_h, sin_h))
    cos_hr, sin_hr = _reference(128, 10000.0, 16, jnp.float32)
    assert cos_h.shape == (16, 128) and sin_h.shape == (16, 128)
    assert jnp.allclose(cos_h, cos_hr, atol=1e-5, rtol=1e-5)
    assert jnp.allclose(sin_h, sin_hr, atol=1e-5, rtol=1e-5)

    print("KERNEL_OK")
</pallas_src>

<mosaic_0001>
module attributes {stable_mosaic.version = 11 : i64} {
  func.func @_rope_cache_kernel(%arg0: i32, %arg1: memref<1x128xf32, #tpu.memory_space<vmem>>, %arg2: memref<1x128xf32, #tpu.memory_space<vmem>>, %arg3: memref<32x256xf32, #tpu.memory_space<vmem>>, %arg4: memref<32x256xf32, #tpu.memory_space<vmem>>) attributes {dimension_semantics = [#tpu.dimension_semantics<parallel>], iteration_bounds = array<i64: 1>, scalar_prefetch = 0 : i64, scratch_operands = 0 : i64, tpu.core_type = #tpu.core_type<tc>, window_params = [{pipeline_mode = #tpu.pipeline_mode<synchronous>, transform_indices = @transform_0, window_bounds = array<i64: 1, 128>}, {pipeline_mode = #tpu.pipeline_mode<synchronous>, transform_indices = @transform_1, window_bounds = array<i64: 1, 128>}, {transform_indices = @transform_2, window_bounds = array<i64: 32, 256>}, {transform_indices = @transform_3, window_bounds = array<i64: 32, 256>}]} {
    %c32_i32 = arith.constant 32 : i32
    %0 = arith.muli %arg0, %c32_i32 : i32
    %1 = tpu.iota {dimensions = array<i32: 0>} : vector<32x128xi32>
    %2 = vector.broadcast %0 : i32 to vector<32x128xi32>
    %3 = arith.addi %2, %1 : vector<32x128xi32>
    %c8_i32 = arith.constant 8 : i32
    %4 = vector.broadcast %c8_i32 : i32 to vector<32x128xi32>
    %5 = arith.muli %3, %4 : vector<32x128xi32>
    %6 = arith.sitofp %5 : vector<32x128xi32> to vector<32x128xf32>
    %c0 = arith.constant 0 : index
    %c0_0 = arith.constant 0 : index
    %7 = vector.load %arg2[%c0, %c0_0] : memref<1x128xf32, #tpu.memory_space<vmem>>, vector<1x128xf32>
    %8 = vector.broadcast %7 : vector<1x128xf32> to vector<32x128xf32>
    %9 = arith.addf %6, %8 : vector<32x128xf32>
    %c0_1 = arith.constant 0 : index
    %c0_2 = arith.constant 0 : index
    %10 = vector.load %arg1[%c0_1, %c0_2] : memref<1x128xf32, #tpu.memory_space<vmem>>, vector<1x128xf32>
    %11 = vector.broadcast %10 : vector<1x128xf32> to vector<32x128xf32>
    %12 = arith.mulf %9, %11 : vector<32x128xf32>
    %13 = math.cos %12 : vector<32x128xf32>
    %14 = math.sin %12 : vector<32x128xf32>
    %15 = vector.extract_strided_slice %13 {offsets = [0, 0], sizes = [32, 16], strides = [1, 1]} : vector<32x128xf32> to vector<32x16xf32>
    %16 = vector.extract_strided_slice %14 {offsets = [0, 0], sizes = [32, 16], strides = [1, 1]} : vector<32x128xf32> to vector<32x16xf32>
    %17 = vector.extract_strided_slice %13 {offsets = [0, 16], sizes = [32, 16], strides = [1, 1]} : vector<32x128xf32> to vector<32x16xf32>
    %18 = vector.extract_strided_slice %14 {offsets = [0, 16], sizes = [32, 16], strides = [1, 1]} : vector<32x128xf32> to vector<32x16xf32>
    %19 = vector.extract_strided_slice %13 {offsets = [0, 32], sizes = [32, 16], strides = [1, 1]} : vector<32x128xf32> to vector<32x16xf32>
    %20 = vector.extract_strided_slice %14 {offsets = [0, 32], sizes = [32, 16], strides = [1, 1]} : vector<32x128xf32> to vector<32x16xf32>
    %21 = vector.extract_strided_slice %13 {offsets = [0, 48], sizes = [32, 16], strides = [1, 1]} : vector<32x128xf32> to vector<32x16xf32>
    %22 = vector.extract_strided_slice %14 {offsets = [0, 48], sizes = [32, 16], strides = [1, 1]} : vector<32x128xf32> to vector<32x16xf32>
    %23 = vector.extract_strided_slice %13 {offsets = [0, 64], sizes = [32, 16], strides = [1, 1]} : vector<32x128xf32> to vector<32x16xf32>
    %24 = vector.extract_strided_slice %14 {offsets = [0, 64], sizes = [32, 16], strides = [1, 1]} : vector<32x128xf32> to vector<32x16xf32>
    %25 = vector.extract_strided_slice %13 {offsets = [0, 80], sizes = [32, 16], strides = [1, 1]} : vector<32x128xf32> to vector<32x16xf32>
    %26 = vector.extract_strided_slice %14 {offsets = [0, 80], sizes = [32, 16], strides = [1, 1]} : vector<32x128xf32> to vector<32x16xf32>
    %27 = vector.extract_strided_slice %13 {offsets = [0, 96], sizes = [32, 16], strides = [1, 1]} : vector<32x128xf32> to vector<32x16xf32>
    %28 = vector.extract_strided_slice %14 {offsets = [0, 96], sizes = [32, 16], strides = [1, 1]} : vector<32x128xf32> to vector<32x16xf32>
    %29 = vector.extract_strided_slice %13 {offsets = [0, 112], sizes = [32, 16], strides = [1, 1]} : vector<32x128xf32> to vector<32x16xf32>
    %30 = vector.extract_strided_slice %14 {offsets = [0, 112], sizes = [32, 16], strides = [1, 1]} : vector<32x128xf32> to vector<32x16xf32>
    %31 = tpu.concatenate %15, %15, %17, %17, %19, %19, %21, %21, %23, %23, %25, %25, %27, %27, %29, %29 in 1 : vector<32x16xf32>, vector<32x16xf32>, vector<32x16xf32>, vector<32x16xf32>, vector<32x16xf32>, vector<32x16xf32>, vector<32x16xf32>, vector<32x16xf32>, vector<32x16xf32>, vector<32x16xf32>, vector<32x16xf32>, vector<32x16xf32>, vector<32x16xf32>, vector<32x16xf32>, vector<32x16xf32>, vector<32x16xf32> -> vector<32x256xf32>
    %c0_3 = arith.constant 0 : index
    %c0_4 = arith.constant 0 : index
    %32 = vector.load %arg3[%c0_3, %c0_4] : memref<32x256xf32, #tpu.memory_space<vmem>>, vector<32x256xf32>
    tpu.vector_store %arg3[%c0_3, %c0_4], %31 {strides = array<i32>} : memref<32x256xf32, #tpu.memory_space<vmem>>, vector<32x256xf32>,
    %33 = tpu.concatenate %16, %16, %18, %18, %20, %20, %22, %22, %24, %24, %26, %26, %28, %28, %30, %30 in 1 : vector<32x16xf32>, vector<32x16xf32>, vector<32x16xf32>, vector<32x16xf32>, vector<32x16xf32>, vector<32x16xf32>, vector<32x16xf32>, vector<32x16xf32>, vector<32x16xf32>, vector<32x16xf32>, vector<32x16xf32>, vector<32x16xf32>, vector<32x16xf32>, vector<32x16xf32>, vector<32x16xf32>, vector<32x16xf32> -> vector<32x256xf32>
    %c0_5 = arith.constant 0 : index
    %c0_6 = arith.constant 0 : index
    %34 = vector.load %arg4[%c0_5, %c0_6] : memref<32x256xf32, #tpu.memory_space<vmem>>, vector<32x256xf32>
    tpu.vector_store %arg4[%c0_5, %c0_6], %33 {strides = array<i32>} : memref<32x256xf32, #tpu.memory_space<vmem>>, vector<32x256xf32>,
    return
  }
  func.func @transform_0(%arg0: i32) -> (i32, i32) {
    %c0_i32 = arith.constant 0 : i32
    %c0_i32_0 = arith.constant 0 : i32
    %c0_i32_1 = arith.constant 0 : i32
    return %c0_i32, %c0_i32_0 : i32, i32
  }
  func.func @transform_1(%arg0: i32) -> (i32, i32) {
    %c0_i32 = arith.constant 0 : i32
    %c0_i32_0 = arith.constant 0 : i32
    %c0_i32_1 = arith.constant 0 : i32
    return %c0_i32, %c0_i32_0 : i32, i32
  }
  func.func @transform_2(%arg0: i32) -> (i32, i32) {
    %c0_i32 = arith.constant 0 : i32
    %c0_i32_0 = arith.constant 0 : i32
    return %arg0, %c0_i32 : i32, i32
  }
  func.func @transform_3(%arg0: i32) -> (i32, i32) {
    %c0_i32 = arith.constant 0 : i32
    %c0_i32_0 = arith.constant 0 : i32
    return %arg0, %c0_i32 : i32, i32
  }
}

</mosaic_0001>

<llo_original>
// kernel: _build_cache.1
$region0: #{_build_cache.1}
  #allocation0 [shape = 'u32[]', space=smem, size = 0x4, offset = 0x4, fixed_abs, tag = 'smem constant byte address 0x4 - core index']
  #allocation1 [shape = 'u32[144,128]{1,0:T(1,128)}', space=vmem, size = 0x12000, scoped, tag = 'internal scratch']
  %s0 = inlined_call_operand.hbm [shape: f32[1,128], index: 0, kind: input, shape index: {}]
  %s1 = inlined_call_operand.vmem [shape: f32[1,128], index: 1, kind: input, shape index: {}]
  %s2 = inlined_call_operand.vmem [shape: f32[32,256], index: 2, kind: output, shape index: {0}]
  %s3 = inlined_call_operand.vmem [shape: f32[32,256], index: 3, kind: output, shape index: {1}]
  %4 = xla_tuple %s2, %s3
  %s5 = sld [smem:[#allocation0]]
  $region30: #{_build_cache.1} parent=0
    _
  %s7 = ssub.s32 1, %s5
  %s8 = scalar_select 0, %s7, %s5
  $region1: #{_build_cache.1} parent=0
    #allocation2 [shape = 'u8[512]{0}', space=vmem, size = 0x400, scoped, tag = 'input window, operand 0, single buffered']
    #allocation3 [shape = 's32[1]{0}', space=sflag, size = 0x4, scoped, tag = 'scoped memory for _build_cache.1']
    %9 = vsyncpa [#allocation3], 0
    // Predicated region
    $region2: #{_build_cache.1} parent=1 // pred_check
      _
    $region3: #{_build_cache.1} parent=1 // pred_check_branch
      %11 = sbr.rel (0) target = $region5
    $region4: #{_build_cache.1} parent=1 // pred_region
      %s13 = ssub.s32 16, 16
      %14 = vsyncadd [#allocation3], %s13
      %s16 = sshll.u32 [#allocation2], 4
      %s17 = int_to_ptr.vmem [resolvable:$true] %s16
      %19 = dma.hbm_to_vmem [thread:$0]  %s0, 16, %s17, [#allocation3]
    $region5: #{_build_cache.1} parent=1 // pred_fallthru
      _
    // Predicated region
    $region6: #{_build_cache.1} parent=1 // pred_check
      _
    $region7: #{_build_cache.1} parent=1 // pred_check_branch
      %21 = sbr.rel (0) target = $region9
    $region8: #{_build_cache.1} parent=1 // pred_region
      _
    $region9: #{_build_cache.1} parent=1 // pred_fallthru
      _
    // Predicated region
    $region10: #{_build_cache.1} parent=1 // pred_check
      _
    $region11: #{_build_cache.1} parent=1 // pred_check_branch
      %23 = sbr.rel (0) target = $region13
    $region12: #{_build_cache.1} parent=1 // pred_region
      %24 = dma.done [#allocation3], 16
    $region13: #{_build_cache.1} parent=1 // pred_fallthru
      _
    %s25 = smul.u32 0, 32
    %v26 = vlaneseq
    %v27 = vshrl.u32 %v26, 7
    %v28 = vadd.s32 %v27, 8
    %v29 = vadd.s32 %v27, 16
    %v30 = vadd.s32 %v27, 24
    %v31 = vstv %s25
    %v32 = vadd.s32 %v31, %v27
    %v33 = vadd.s32 %v31, %v28
    %v34 = vadd.s32 %v31, %v29
    %v35 = vadd.s32 %v31, %v30
    %v36 = vmul.u32 %v32, 8
    %v37 = vmul.u32 %v33, 8
    %v38 = vmul.u32 %v34, 8
    %v39 = vmul.u32 %v35, 8
    %v40 = vcvt.s32.f32 %v36
    %v41 = vcvt.s32.f32 %v37
    %v42 = vcvt.s32.f32 %v38
    %v43 = vcvt.s32.f32 %v39
    %v44 = vld [vmem:[%s1] sm:$0x1]
    %v46 = vlaneseq
    %v47 = vshrl.u32 %v46, 7
    %v48 = vsub.s32 0, %v47
    %v49 = vrot.slane %v44, %v48
    %v51 = vadd.f32 %v40, %v49
    %v52 = vadd.f32 %v41, %v49
    %v53 = vadd.f32 %v42, %v49
    %v54 = vadd.f32 %v43, %v49
    %v55 = vld [vmem:[#allocation2] sm:$0x1]
    %v57 = vlaneseq
    %v58 = vshrl.u32 %v57, 7
    %v59 = vsub.s32 0, %v58
    %v60 = vrot.slane %v55, %v59
    %v62 = vmul.f32 %v51, %v60
    %v63 = vmul.f32 %v52, %v60
    %v64 = vmul.f32 %v53, %v60
    %v65 = vmul.f32 %v54, %v60
    %v66 = vand.u32 2147483647, %v62
    %vm67 = vcmp.le.f32.partialorder %v66, 0.7853982
    %vm68 = vcmp.lt.s32.totalorder %v62, 0
    %v69 = vand.u32 %v62, 2139095040
    %v70 = vshrl.u32 %v69, 23
    %v71 = vsub.s32 %v70, 127
    %v72 = vand.u32 2147483647, %v62
    %v73 = vand.u32 %v72, 8388607
    %v74 = vor.u32 %v73, 8388608
    %v75 = vsub.s32 0, %v74
    %v76 = vadd.s32 %v71, 1
    %vm77 = vcmp.gt.s32.totalorder %v76, 0
    %v78 = vsel %vm77, %v76, 0
    %v79 = vshrl.u32 %v78, 5
    %v80 = vand.u32 %v78, 31
    %v81 = vsub.s32 32, %v80
    %v82 = vshrl.u32 683565275, %v81
    %v83 = vshll.u32 683565275, %v80
    %v84 = vshrl.u32 2475754826, %v81
    %v85 = vor.u32 %v83, %v84
    %v86 = vshll.u32 2475754826, %v80
    %v87 = vshrl.u32 2131351028, %v81
    %v88 = vor.u32 %v86, %v87
    %v89 = vshll.u32 2131351028, %v80
    %v90 = vshrl.u32 2102212464, %v81
    %v91 = vor.u32 %v89, %v90
    %v92 = vshll.u32 2102212464, %v80
    %v93 = vshrl.u32 920167782, %v81
    %v94 = vor.u32 %v92, %v93
    %v95 = vshll.u32 920167782, %v80
    %v96 = vshrl.u32 1326507024, %v81
    %v97 = vor.u32 %v95, %v96
    %vm98 = vcmp.lt.s32.totalorder %v79, 1
    %vm99 = vcmp.lt.s32.totalorder %v79, 2
    %vm100 = vcmp.lt.s32.totalorder %v79, 3
    %vm101 = vcmp.lt.s32.totalorder %v79, 4
    %v102 = vsel %vm98, %v82, %v85
    %v103 = vsel %vm101, %v91, 2102212464
    %v104 = vsel %vm100, %v88, %v103
    %v105 = vsel %vm99, %v102, %v104
    %v106 = vsel %vm98, %v85, %v88
    %v107 = vsel %vm101, %v94, 920167782
    %v108 = vsel %vm100, %v91, %v107
    %v109 = vsel %vm99, %v106, %v108
    %v110 = vsel %vm98, %v88, %v91
    %v111 = vsel %vm101, %v97, 1326507024
    %v112 = vsel %vm100, %v94, %v111
    %v113 = vsel %vm99, %v110, %v112
    %v114 = vshll.u32 %v74, 8
    %v115 = vmul.u32.u64.compose %v114, %v113
    %v116 = vextract.low.u32 %v115
    %v117 = vextract.high.u32 %v115
    %v118 = vmul.u32.u64.compose %v114, %v109
    %v119 = vextract.low.u32 %v118
    %v120 = vextract.high.u32 %v118
    %v121 = vmul.u32 %v114, %v105
    %v122 = vadd.s32 %v117, %v119
    %vm123 = vc.u32 %v117, %v119
    %v124 = vadd.s32 %v120, 1
    %v125 = vsel %vm123, %v124, %v120
    %v126 = vadd.s32 %v121, %v125
    %v127 = vadd.s32 %v126, 536870912
    %v128 = vshrl.u32 %v127, 30
    %v129 = vshll.u32 %v128, 30
    %v130 = vsub.s32 %v126, %v129
    %vm131 = vcmp.lt.s32.totalorder %v130, 0
    %v132 = vsub.s32 0, %v130
    %v133 = vsel %vm131, %v132, %v130
    %v134 = vclz %v133
    %v135 = vsub.s32 %v134, 2
    %vm136 = vcmp.gt.s32.totalorder 0, %v135
    %v137 = vsel %vm136, 0, %v135
    %v138 = vsub.s32 32, %v137
    %v139 = vshll.u32 %v130, %v137
    %v140 = vshrl.u32 %v122, %v138
    %v141 = vor.u32 %v139, %v140
    %v142 = vsub.s32 4294967266, %v137
    %v143 = vadd.s32 %v142, 127
    %v144 = vshll.u32 %v143, 23
    %v145 = vor.u32 4788187, %v144
    %v146 = vand.u32 2147483647, %v145
    %v148 = vcvt.s32.f32 %v141
    %v149 = vmul.f32 %v148, %v146
    %v150 = vxor.u32 %v149, 2147483648
    %v151 = vsel %vm68, %v150, %v149
    %v152 = vsub.s32 4, %v128
    %v153 = vsel %vm68, %v152, %v128
    %v154 = vsel %vm67, %v62, %v151
    %v155 = vsel %vm67, 0, %v153
    %v156 = vcosq.f32.pop %v154
    %v157 = vsinq.f32.pop %v154
    %vm158 = vweird.f32 %v62
    %v159 = vand.u32 %v155, 3
    %vm160 = vcmp.lt.s32.totalorder %v159, 2
    %vm161 = vcmp.eq.s32.totalorder %v159, 0
    %v162 = vxor.u32 %v157, 2147483648
    %v163 = vsel %vm161, %v156, %v162
    %vm164 = vcmp.eq.s32.totalorder %v159, 2
    %v165 = vxor.u32 %v156, 2147483648
    %v166 = vsel %vm164, %v165, %v157
    %v167 = vsel %vm160, %v163, %v166
    %v168 = vsel %vm158, nan, %v167
    %v169 = vand.u32 2147483647, %v63
    %vm170 = vcmp.le.f32.partialorder %v169, 0.7853982
    %vm171 = vcmp.lt.s32.totalorder %v63, 0
    %v172 = vand.u32 %v63, 2139095040
    %v173 = vshrl.u32 %v172, 23
    %v174 = vsub.s32 %v173, 127
    %v175 = vand.u32 2147483647, %v63
    %v176 = vand.u32 %v175, 8388607
    %v177 = vor.u32 %v176, 8388608
    %v178 = vsub.s32 0, %v177
    %v179 = vadd.s32 %v174, 1
    %vm180 = vcmp.gt.s32.totalorder %v179, 0
    %v181 = vsel %vm180, %v179, 0
    %v182 = vshrl.u32 %v181, 5
    %v183 = vand.u32 %v181, 31
    %v184 = vsub.s32 32, %v183
    %v185 = vshrl.u32 683565275, %v184
    %v186 = vshll.u32 683565275, %v183
    %v187 = vshrl.u32 2475754826, %v184
    %v188 = vor.u32 %v186, %v187
    %v189 = vshll.u32 2475754826, %v183
    %v190 = vshrl.u32 2131351028, %v184
    %v191 = vor.u32 %v189, %v190
    %v192 = vshll.u32 2131351028, %v183
    %v193 = vshrl.u32 2102212464, %v184
    %v194 = vor.u32 %v192, %v193
    %v195 = vshll.u32 2102212464, %v183
    %v196 = vshrl.u32 920167782, %v184
    %v197 = vor.u32 %v195, %v196
    %v198 = vshll.u32 920167782, %v183
    %v199 = vshrl.u32 1326507024, %v184
    %v200 = vor.u32 %v198, %v199
    %vm201 = vcmp.lt.s32.totalorder %v182, 1
    %vm202 = vcmp.lt.s32.totalorder %v182, 2
    %vm203 = vcmp.lt.s32.totalorder %v182, 3
    %vm204 = vcmp.lt.s32.totalorder %v182, 4
    %v205 = vsel %vm201, %v185, %v188
    %v206 = vsel %vm204, %v194, 2102212464
    %v207 = vsel %vm203, %v191, %v206
    %v208 = vsel %vm202, %v205, %v207
    %v209 = vsel %vm201, %v188, %v191
    %v210 = vsel %vm204, %v197, 920167782
    %v211 = vsel %vm203, %v194, %v210
    %v212 = vsel %vm202, %v209, %v211
    %v213 = vsel %vm201, %v191, %v194
    %v214 = vsel %vm204, %v200, 1326507024
    %v215 = vsel %vm203, %v197, %v214
    %v216 = vsel %vm202, %v213, %v215
    %v217 = vshll.u32 %v177, 8
    %v218 = vmul.u32.u64.compose %v217, %v216
    %v219 = vextract.low.u32 %v218
    %v220 = vextract.high.u32 %v218
    %v221 = vmul.u32.u64.compose %v217, %v212
    %v222 = vextract.low.u32 %v221
    %v223 = vextract.high.u32 %v221
    %v224 = vmul.u32 %v217, %v208
    %v225 = vadd.s32 %v220, %v222
    %vm226 = vc.u32 %v220, %v222
    %v227 = vadd.s32 %v223, 1
    %v228 = vsel %vm226, %v227, %v223
    %v229 = vadd.s32 %v224, %v228
    %v230 = vadd.s32 %v229, 536870912
    %v231 = vshrl.u32 %v230, 30
    %v232 = vshll.u32 %v231, 30
    %v233 = vsub.s32 %v229, %v232
    %vm234 = vcmp.lt.s32.totalorder %v233, 0
    %v235 = vsub.s32 0, %v233
    %v236 = vsel %vm234, %v235, %v233
    %v237 = vclz %v236
    %v238 = vsub.s32 %v237, 2
    %vm239 = vcmp.gt.s32.totalorder 0, %v238
    %v240 = vsel %vm239, 0, %v238
    %v241 = vsub.s32 32, %v240
    %v242 = vshll.u32 %v233, %v240
    %v243 = vshrl.u32 %v225, %v241
    %v244 = vor.u32 %v242, %v243
    %v245 = vsub.s32 4294967266, %v240
    %v246 = vadd.s32 %v245, 127
    %v247 = vshll.u32 %v246, 23
    %v248 = vor.u32 4788187, %v247
    %v249 = vand.u32 2147483647, %v248
    %v251 = vcvt.s32.f32 %v244
    %v252 = vmul.f32 %v251, %v249
    %v253 = vxor.u32 %v252, 2147483648
    %v254 = vsel %vm171, %v253, %v252
    %v255 = vsub.s32 4, %v231
    %v256 = vsel %vm171, %v255, %v231
    %v257 = vsel %vm170, %v63, %v254
    %v258 = vsel %vm170, 0, %v256
    %v259 = vcosq.f32.pop %v257
    %v260 = vsinq.f32.pop %v257
    %vm261 = vweird.f32 %v63
    %v262 = vand.u32 %v258, 3
    %vm263 = vcmp.lt.s32.totalorder %v262, 2
    %vm264 = vcmp.eq.s32.totalorder %v262, 0
    %v265 = vxor.u32 %v260, 2147483648
    %v266 = vsel %vm264, %v259, %v265
    %vm267 = vcmp.eq.s32.totalorder %v262, 2
    %v268 = vxor.u32 %v259, 2147483648
    %v269 = vsel %vm267, %v268, %v260
    %v270 = vsel %vm263, %v266, %v269
    %v271 = vsel %vm261, nan, %v270
    %v272 = vand.u32 2147483647, %v64
    %vm273 = vcmp.le.f32.partialorder %v272, 0.7853982
    %vm274 = vcmp.lt.s32.totalorder %v64, 0
    %v275 = vand.u32 %v64, 2139095040
    %v276 = vshrl.u32 %v275, 23
    %v277 = vsub.s32 %v276, 127
    %v278 = vand.u32 2147483647, %v64
    %v279 = vand.u32 %v278, 8388607
    %v280 = vor.u32 %v279, 8388608
    %v281 = vsub.s32 0, %v280
    %v282 = vadd.s32 %v277, 1
    %vm283 = vcmp.gt.s32.totalorder %v282, 0
    %v284 = vsel %vm283, %v282, 0
    %v285 = vshrl.u32 %v284, 5
    %v286 = vand.u32 %v284, 31
    %v287 = vsub.s32 32, %v286
    %v288 = vshrl.u32 683565275, %v287
    %v289 = vshll.u32 683565275, %v286
    %v290 = vshrl.u32 2475754826, %v287
    %v291 = vor.u32 %v289, %v290
    %v292 = vshll.u32 2475754826, %v286
    %v293 = vshrl.u32 2131351028, %v287
    %v294 = vor.u32 %v292, %v293
    %v295 = vshll.u32 2131351028, %v286
    %v296 = vshrl.u32 2102212464, %v287
    %v297 = vor.u32 %v295, %v296
    %v298 = vshll.u32 2102212464, %v286
    %v299 = vshrl.u32 920167782, %v287
    %v300 = vor.u32 %v298, %v299
    %v301 = vshll.u32 920167782, %v286
    %v302 = vshrl.u32 1326507024, %v287
    %v303 = vor.u32 %v301, %v302
    %vm304 = vcmp.lt.s32.totalorder %v285, 1
    %vm305 = vcmp.lt.s32.totalorder %v285, 2
    %vm306 = vcmp.lt.s32.totalorder %v285, 3
    %vm307 = vcmp.lt.s32.totalorder %v285, 4
    %v308 = vsel %vm304, %v288, %v291
    %v309 = vsel %vm307, %v297, 2102212464
    %v310 = vsel %vm306, %v294, %v309
    %v311 = vsel %vm305, %v308, %v310
    %v312 = vsel %vm304, %v291, %v294
    %v313 = vsel %vm307, %v300, 920167782
    %v314 = vsel %vm306, %v297, %v313
    %v315 = vsel %vm305, %v312, %v314
    %v316 = vsel %vm304, %v294, %v297
    %v317 = vsel %vm307, %v303, 1326507024
    %v318 = vsel %vm306, %v300, %v317
    %v319 = vsel %vm305, %v316, %v318
    %v320 = vshll.u32 %v280, 8
    %v321 = vmul.u32.u64.compose %v320, %v319
    %v322 = vextract.low.u32 %v321
    %v323 = vextract.high.u32 %v321
    %v324 = vmul.u32.u64.compose %v320, %v315
    %v325 = vextract.low.u32 %v324
    %v326 = vextract.high.u32 %v324
    %v327 = vmul.u32 %v320, %v311
    %v328 = vadd.s32 %v323, %v325
    %vm329 = vc.u32 %v323, %v325
    %v330 = vadd.s32 %v326, 1
    %v331 = vsel %vm329, %v330, %v326
    %v332 = vadd.s32 %v327, %v331
    %v333 = vadd.s32 %v332, 536870912
    %v334 = vshrl.u32 %v333, 30
    %v335 = vshll.u32 %v334, 30
    %v336 = vsub.s32 %v332, %v335
    %vm337 = vcmp.lt.s32.totalorder %v336, 0
    %v338 = vsub.s32 0, %v336
    %v339 = vsel %vm337, %v338, %v336
    %v340 = vclz %v339
    %v341 = vsub.s32 %v340, 2
    %vm342 = vcmp.gt.s32.totalorder 0, %v341
    %v343 = vsel %vm342, 0, %v341
    %v344 = vsub.s32 32, %v343
    %v345 = vshll.u32 %v336, %v343
    %v346 = vshrl.u32 %v328, %v344
    %v347 = vor.u32 %v345, %v346
    %v348 = vsub.s32 4294967266, %v343
    %v349 = vadd.s32 %v348, 127
    %v350 = vshll.u32 %v349, 23
    %v351 = vor.u32 4788187, %v350
    %v352 = vand.u32 2147483647, %v351
    %v354 = vcvt.s32.f32 %v347
    %v355 = vmul.f32 %v354, %v352
    %v356 = vxor.u32 %v355, 2147483648
    %v357 = vsel %vm274, %v356, %v355
    %v358 = vsub.s32 4, %v334
    %v359 = vsel %vm274, %v358, %v334
    %v360 = vsel %vm273, %v64, %v357
    %v361 = vsel %vm273, 0, %v359
    %v362 = vcosq.f32.pop %v360
    %v363 = vsinq.f32.pop %v360
    %vm364 = vweird.f32 %v64
    %v365 = vand.u32 %v361, 3
    %vm366 = vcmp.lt.s32.totalorder %v365, 2
    %vm367 = vcmp.eq.s32.totalorder %v365, 0
    %v368 = vxor.u32 %v363, 2147483648
    %v369 = vsel %vm367, %v362, %v368
    %vm370 = vcmp.eq.s32.totalorder %v365, 2
    %v371 = vxor.u32 %v362, 2147483648
    %v372 = vsel %vm370, %v371, %v363
    %v373 = vsel %vm366, %v369, %v372
    %v374 = vsel %vm364, nan, %v373
    %v375 = vand.u32 2147483647, %v65
    %vm376 = vcmp.le.f32.partialorder %v375, 0.7853982
    %vm377 = vcmp.lt.s32.totalorder %v65, 0
    %v378 = vand.u32 %v65, 2139095040
    %v379 = vshrl.u32 %v378, 23
    %v380 = vsub.s32 %v379, 127
    %v381 = vand.u32 2147483647, %v65
    %v382 = vand.u32 %v381, 8388607
    %v383 = vor.u32 %v382, 8388608
    %v384 = vsub.s32 0, %v383
    %v385 = vadd.s32 %v380, 1
    %vm386 = vcmp.gt.s32.totalorder %v385, 0
    %v387 = vsel %vm386, %v385, 0
    %v388 = vshrl.u32 %v387, 5
    %v389 = vand.u32 %v387, 31
    %v390 = vsub.s32 32, %v389
    %v391 = vshrl.u32 683565275, %v390
    %v392 = vshll.u32 683565275, %v389
    %v393 = vshrl.u32 2475754826, %v390
    %v394 = vor.u32 %v392, %v393
    %v395 = vshll.u32 2475754826, %v389
    %v396 = vshrl.u32 2131351028, %v390
    %v397 = vor.u32 %v395, %v396
    %v398 = vshll.u32 2131351028, %v389
    %v399 = vshrl.u32 2102212464, %v390
    %v400 = vor.u32 %v398, %v399
    %v401 = vshll.u32 2102212464, %v389
    %v402 = vshrl.u32 920167782, %v390
    %v403 = vor.u32 %v401, %v402
    %v404 = vshll.u32 920167782, %v389
    %v405 = vshrl.u32 1326507024, %v390
    %v406 = vor.u32 %v404, %v405
    %vm407 = vcmp.lt.s32.totalorder %v388, 1
    %vm408 = vcmp.lt.s32.totalorder %v388, 2
    %vm409 = vcmp.lt.s32.totalorder %v388, 3
    %vm410 = vcmp.lt.s32.totalorder %v388, 4
    %v411 = vsel %vm407, %v391, %v394
    %v412 = vsel %vm410, %v400, 2102212464
    %v413 = vsel %vm409, %v397, %v412
    %v414 = vsel %vm408, %v411, %v413
    %v415 = vsel %vm407, %v394, %v397
    %v416 = vsel %vm410, %v403, 920167782
    %v417 = vsel %vm409, %v400, %v416
    %v418 = vsel %vm408, %v415, %v417
    %v419 = vsel %vm407, %v397, %v400
    %v420 = vsel %vm410, %v406, 1326507024
    %v421 = vsel %vm409, %v403, %v420
    %v422 = vsel %vm408, %v419, %v421
    %v423 = vshll.u32 %v383, 8
    %v424 = vmul.u32.u64.compose %v423, %v422
    %v425 = vextract.low.u32 %v424
    %v426 = vextract.high.u32 %v424
    %v427 = vmul.u32.u64.compose %v423, %v418
    %v428 = vextract.low.u32 %v427
    %v429 = vextract.high.u32 %v427
    %v430 = vmul.u32 %v423, %v414
    %v431 = vadd.s32 %v426, %v428
    %vm432 = vc.u32 %v426, %v428
    %v433 = vadd.s32 %v429, 1
    %v434 = vsel %vm432, %v433, %v429
    %v435 = vadd.s32 %v430, %v434
    %v436 = vadd.s32 %v435, 536870912
    %v437 = vshrl.u32 %v436, 30
    %v438 = vshll.u32 %v437, 30
    %v439 = vsub.s32 %v435, %v438
    %vm440 = vcmp.lt.s32.totalorder %v439, 0
    %v441 = vsub.s32 0, %v439
    %v442 = vsel %vm440, %v441, %v439
    %v443 = vclz %v442
    %v444 = vsub.s32 %v443, 2
    %vm445 = vcmp.gt.s32.totalorder 0, %v444
    %v446 = vsel %vm445, 0, %v444
    %v447 = vsub.s32 32, %v446
    %v448 = vshll.u32 %v439, %v446
    %v449 = vshrl.u32 %v431, %v447
    %v450 = vor.u32 %v448, %v449
    %v451 = vsub.s32 4294967266, %v446
    %v452 = vadd.s32 %v451, 127
    %v453 = vshll.u32 %v452, 23
    %v454 = vor.u32 4788187, %v453
    %v455 = vand.u32 2147483647, %v454
    %v457 = vcvt.s32.f32 %v450
    %v458 = vmul.f32 %v457, %v455
    %v459 = vxor.u32 %v458, 2147483648
    %v460 = vsel %vm377, %v459, %v458
    %v461 = vsub.s32 4, %v437
    %v462 = vsel %vm377, %v461, %v437
    %v463 = vsel %vm376, %v65, %v460
    %v464 = vsel %vm376, 0, %v462
    %v465 = vcosq.f32.pop %v463
    %v466 = vsinq.f32.pop %v463
    %vm467 = vweird.f32 %v65
    %v468 = vand.u32 %v464, 3
    %vm469 = vcmp.lt.s32.totalorder %v468, 2
    %vm470 = vcmp.eq.s32.totalorder %v468, 0
    %v471 = vxor.u32 %v466, 2147483648
    %v472 = vsel %vm470, %v465, %v471
    %vm473 = vcmp.eq.s32.totalorder %v468, 2
    %v474 = vxor.u32 %v465, 2147483648
    %v475 = vsel %vm473, %v474, %v466
    %v476 = vsel %vm469, %v472, %v475
    %v477 = vsel %vm467, nan, %v476
    %v478 = vand.u32 2147483647, %v62
    %vm479 = vcmp.le.f32.partialorder %v478, 0.7853982
    %vm480 = vcmp.lt.s32.totalorder %v62, 0
    %v481 = vand.u32 %v62, 2139095040
    %v482 = vshrl.u32 %v481, 23
    %v483 = vsub.s32 %v482, 127
    %v484 = vand.u32 2147483647, %v62
    %v485 = vand.u32 %v484, 8388607
    %v486 = vor.u32 %v485, 8388608
    %v487 = vsub.s32 0, %v486
    %v488 = vadd.s32 %v483, 1
    %vm489 = vcmp.gt.s32.totalorder %v488, 0
    %v490 = vsel %vm489, %v488, 0
    %v491 = vshrl.u32 %v490, 5
    %v492 = vand.u32 %v490, 31
    %v493 = vsub.s32 32, %v492
    %v494 = vshrl.u32 683565275, %v493
    %v495 = vshll.u32 683565275, %v492
    %v496 = vshrl.u32 2475754826, %v493
    %v497 = vor.u32 %v495, %v496
    %v498 = vshll.u32 2475754826, %v492
    %v499 = vshrl.u32 2131351028, %v493
    %v500 = vor.u32 %v498, %v499
    %v501 = vshll.u32 2131351028, %v492
    %v502 = vshrl.u32 2102212464, %v493
    %v503 = vor.u32 %v501, %v502
    %v504 = vshll.u32 2102212464, %v492
    %v505 = vshrl.u32 920167782, %v493
    %v506 = vor.u32 %v504, %v505
    %v507 = vshll.u32 920167782, %v492
    %v508 = vshrl.u32 1326507024, %v493
    %v509 = vor.u32 %v507, %v508
    %vm510 = vcmp.lt.s32.totalorder %v491, 1
    %vm511 = vcmp.lt.s32.totalorder %v491, 2
    %vm512 = vcmp.lt.s32.totalorder %v491, 3
    %vm513 = vcmp.lt.s32.totalorder %v491, 4
    %v514 = vsel %vm510, %v494, %v497
    %v515 = vsel %vm513, %v503, 2102212464
    %v516 = vsel %vm512, %v500, %v515
    %v517 = vsel %vm511, %v514, %v516
    %v518 = vsel %vm510, %v497, %v500
    %v519 = vsel %vm513, %v506, 920167782
    %v520 = vsel %vm512, %v503, %v519
    %v521 = vsel %vm511, %v518, %v520
    %v522 = vsel %vm510, %v500, %v503
    %v523 = vsel %vm513, %v509, 1326507024
    %v524 = vsel %vm512, %v506, %v523
    %v525 = vsel %vm511, %v522, %v524
    %v526 = vshll.u32 %v486, 8
    %v527 = vmul.u32.u64.compose %v526, %v525
    %v528 = vextract.low.u32 %v527
    %v529 = vextract.high.u32 %v527
    %v530 = vmul.u32.u64.compose %v526, %v521
    %v531 = vextract.low.u32 %v530
    %v532 = vextract.high.u32 %v530
    %v533 = vmul.u32 %v526, %v517
    %v534 = vadd.s32 %v529, %v531
    %vm535 = vc.u32 %v529, %v531
    %v536 = vadd.s32 %v532, 1
    %v537 = vsel %vm535, %v536, %v532
    %v538 = vadd.s32 %v533, %v537
    %v539 = vadd.s32 %v538, 536870912
    %v540 = vshrl.u32 %v539, 30
    %v541 = vshll.u32 %v540, 30
    %v542 = vsub.s32 %v538, %v541
    %vm543 = vcmp.lt.s32.totalorder %v542, 0
    %v544 = vsub.s32 0, %v542
    %v545 = vsel %vm543, %v544, %v542
    %v546 = vclz %v545
    %v547 = vsub.s32 %v546, 2
    %vm548 = vcmp.gt.s32.totalorder 0, %v547
    %v549 = vsel %vm548, 0, %v547
    %v550 = vsub.s32 32, %v549
    %v551 = vshll.u32 %v542, %v549
    %v552 = vshrl.u32 %v534, %v550
    %v553 = vor.u32 %v551, %v552
    %v554 = vsub.s32 4294967266, %v549
    %v555 = vadd.s32 %v554, 127
    %v556 = vshll.u32 %v555, 23
    %v557 = vor.u32 4788187, %v556
    %v558 = vand.u32 2147483647, %v557
    %v560 = vcvt.s32.f32 %v553
    %v561 = vmul.f32 %v560, %v558
    %v562 = vxor.u32 %v561, 2147483648
    %v563 = vsel %vm480, %v562, %v561
    %v564 = vsub.s32 4, %v540
    %v565 = vsel %vm480, %v564, %v540
    %v566 = vsel %vm479, %v62, %v563
    %v567 = vsel %vm479, 0, %v565
    %v568 = vcosq.f32.pop %v566
    %v569 = vsinq.f32.pop %v566
    %vm570 = vweird.f32 %v62
    %v571 = vadd.s32 %v567, 3
    %v572 = vand.u32 %v571, 3
    %vm573 = vcmp.lt.s32.totalorder %v572, 2
    %vm574 = vcmp.eq.s32.totalorder %v572, 0
    %v575 = vxor.u32 %v569, 2147483648
    %v576 = vsel %vm574, %v568, %v575
    %vm577 = vcmp.eq.s32.totalorder %v572, 2
    %v578 = vxor.u32 %v568, 2147483648
    %v579 = vsel %vm577, %v578, %v569
    %v580 = vsel %vm573, %v576, %v579
    %v581 = vsel %vm570, nan, %v580
    %v582 = vand.u32 2147483647, %v63
    %vm583 = vcmp.le.f32.partialorder %v582, 0.7853982
    %vm584 = vcmp.lt.s32.totalorder %v63, 0
    %v585 = vand.u32 %v63, 2139095040
    %v586 = vshrl.u32 %v585, 23
    %v587 = vsub.s32 %v586, 127
    %v588 = vand.u32 2147483647, %v63
    %v589 = vand.u32 %v588, 8388607
    %v590 = vor.u32 %v589, 8388608
    %v591 = vsub.s32 0, %v590
    %v592 = vadd.s32 %v587, 1
    %vm593 = vcmp.gt.s32.totalorder %v592, 0
    %v594 = vsel %vm593, %v592, 0
    %v595 = vshrl.u32 %v594, 5
    %v596 = vand.u32 %v594, 31
    %v597 = vsub.s32 32, %v596
    %v598 = vshrl.u32 683565275, %v597
    %v599 = vshll.u32 683565275, %v596
    %v600 = vshrl.u32 2475754826, %v597
    %v601 = vor.u32 %v599, %v600
    %v602 = vshll.u32 2475754826, %v596
    %v603 = vshrl.u32 2131351028, %v597
    %v604 = vor.u32 %v602, %v603
    %v605 = vshll.u32 2131351028, %v596
    %v606 = vshrl.u32 2102212464, %v597
    %v607 = vor.u32 %v605, %v606
    %v608 = vshll.u32 2102212464, %v596
    %v609 = vshrl.u32 920167782, %v597
    %v610 = vor.u32 %v608, %v609
    %v611 = vshll.u32 920167782, %v596
    %v612 = vshrl.u32 1326507024, %v597
    %v613 = vor.u32 %v611, %v612
    %vm614 = vcmp.lt.s32.totalorder %v595, 1
    %vm615 = vcmp.lt.s32.totalorder %v595, 2
    %vm616 = vcmp.lt.s32.totalorder %v595, 3
    %vm617 = vcmp.lt.s32.totalorder %v595, 4
    %v618 = vsel %vm614, %v598, %v601
    %v619 = vsel %vm617, %v607, 2102212464
    %v620 = vsel %vm616, %v604, %v619
    %v621 = vsel %vm615, %v618, %v620
    %v622 = vsel %vm614, %v601, %v604
    %v623 = vsel %vm617, %v610, 920167782
    %v624 = vsel %vm616, %v607, %v623
    %v625 = vsel %vm615, %v622, %v624
    %v626 = vsel %vm614, %v604, %v607
    %v627 = vsel %vm617, %v613, 1326507024
    %v628 = vsel %vm616, %v610, %v627
    %v629 = vsel %vm615, %v626, %v628
    %v630 = vshll.u32 %v590, 8
    %v631 = vmul.u32.u64.compose %v630, %v629
    %v632 = vextract.low.u32 %v631
    %v633 = vextract.high.u32 %v631
    %v634 = vmul.u32.u64.compose %v630, %v625
    %v635 = vextract.low.u32 %v634
    %v636 = vextract.high.u32 %v634
    %v637 = vmul.u32 %v630, %v621
    %v638 = vadd.s32 %v633, %v635
    %vm639 = vc.u32 %v633, %v635
    %v640 = vadd.s32 %v636, 1
    %v641 = vsel %vm639, %v640, %v636
    %v642 = vadd.s32 %v637, %v641
    %v643 = vadd.s32 %v642, 536870912
    %v644 = vshrl.u32 %v643, 30
    %v645 = vshll.u32 %v644, 30
    %v646 = vsub.s32 %v642, %v645
    %vm647 = vcmp.lt.s32.totalorder %v646, 0
    %v648 = vsub.s32 0, %v646
    %v649 = vsel %vm647, %v648, %v646
    %v650 = vclz %v649
    %v651 = vsub.s32 %v650, 2
    %vm652 = vcmp.gt.s32.totalorder 0, %v651
    %v653 = vsel %vm652, 0, %v651
    %v654 = vsub.s32 32, %v653
    %v655 = vshll.u32 %v646, %v653
    %v656 = vshrl.u32 %v638, %v654
    %v657 = vor.u32 %v655, %v656
    %v658 = vsub.s32 4294967266, %v653
    %v659 = vadd.s32 %v658, 127
    %v660 = vshll.u32 %v659, 23
    %v661 = vor.u32 4788187, %v660
    %v662 = vand.u32 2147483647, %v661
    %v664 = vcvt.s32.f32 %v657
    %v665 = vmul.f32 %v664, %v662
    %v666 = vxor.u32 %v665, 2147483648
    %v667 = vsel %vm584, %v666, %v665
    %v668 = vsub.s32 4, %v644
    %v669 = vsel %vm584, %v668, %v644
    %v670 = vsel %vm583, %v63, %v667
    %v671 = vsel %vm583, 0, %v669
    %v672 = vcosq.f32.pop %v670
    %v673 = vsinq.f32.pop %v670
    %vm674 = vweird.f32 %v63
    %v675 = vadd.s32 %v671, 3
    %v676 = vand.u32 %v675, 3
    %vm677 = vcmp.lt.s32.totalorder %v676, 2
    %vm678 = vcmp.eq.s32.totalorder %v676, 0
    %v679 = vxor.u32 %v673, 2147483648
    %v680 = vsel %vm678, %v672, %v679
    %vm681 = vcmp.eq.s32.totalorder %v676, 2
    %v682 = vxor.u32 %v672, 2147483648
    %v683 = vsel %vm681, %v682, %v673
    %v684 = vsel %vm677, %v680, %v683
    %v685 = vsel %vm674, nan, %v684
    %v686 = vand.u32 2147483647, %v64
    %vm687 = vcmp.le.f32.partialorder %v686, 0.7853982
    %vm688 = vcmp.lt.s32.totalorder %v64, 0
    %v689 = vand.u32 %v64, 2139095040
    %v690 = vshrl.u32 %v689, 23
    %v691 = vsub.s32 %v690, 127
    %v692 = vand.u32 2147483647, %v64
    %v693 = vand.u32 %v692, 8388607
    %v694 = vor.u32 %v693, 8388608
    %v695 = vsub.s32 0, %v694
    %v696 = vadd.s32 %v691, 1
    %vm697 = vcmp.gt.s32.totalorder %v696, 0
    %v698 = vsel %vm697, %v696, 0
    %v699 = vshrl.u32 %v698, 5
    %v700 = vand.u32 %v698, 31
    %v701 = vsub.s32 32, %v700
    %v702 = vshrl.u32 683565275, %v701
    %v703 = vshll.u32 683565275, %v700
    %v704 = vshrl.u32 2475754826, %v701
    %v705 = vor.u32 %v703, %v704
    %v706 = vshll.u32 2475754826, %v700
    %v707 = vshrl.u32 2131351028, %v701
    %v708 = vor.u32 %v706, %v707
    %v709 = vshll.u32 2131351028, %v700
    %v710 = vshrl.u32 2102212464, %v701
    %v711 = vor.u32 %v709, %v710
    %v712 = vshll.u32 2102212464, %v700
    %v713 = vshrl.u32 920167782, %v701
    %v714 = vor.u32 %v712, %v713
    %v715 = vshll.u32 920167782, %v700
    %v716 = vshrl.u32 1326507024, %v701
    %v717 = vor.u32 %v715, %v716
    %vm718 = vcmp.lt.s32.totalorder %v699, 1
    %vm719 = vcmp.lt.s32.totalorder %v699, 2
    %vm720 = vcmp.lt.s32.totalorder %v699, 3
    %vm721 = vcmp.lt.s32.totalorder %v699, 4
    %v722 = vsel %vm718, %v702, %v705
    %v723 = vsel %vm721, %v711, 2102212464
    %v724 = vsel %vm720, %v708, %v723
    %v725 = vsel %vm719, %v722, %v724
    %v726 = vsel %vm718, %v705, %v708
    %v727 = vsel %vm721, %v714, 920167782
    %v728 = vsel %vm720, %v711, %v727
    %v729 = vsel %vm719, %v726, %v728
    %v730 = vsel %vm718, %v708, %v711
    %v731 = vsel %vm721, %v717, 1326507024
    %v732 = vsel %vm720, %v714, %v731
    %v733 = vsel %vm719, %v730, %v732
    %v734 = vshll.u32 %v694, 8
    %v735 = vmul.u32.u64.compose %v734, %v733
    %v736 = vextract.low.u32 %v735
    %v737 = vextract.high.u32 %v735
    %v738 = vmul.u32.u64.compose %v734, %v729
    %v739 = vextract.low.u32 %v738
    %v740 = vextract.high.u32 %v738
    %v741 = vmul.u32 %v734, %v725
    %v742 = vadd.s32 %v737, %v739
    %vm743 = vc.u32 %v737, %v739
    %v744 = vadd.s32 %v740, 1
    %v745 = vsel %vm743, %v744, %v740
    %v746 = vadd.s32 %v741, %v745
    %v747 = vadd.s32 %v746, 536870912
    %v748 = vshrl.u32 %v747, 30
    %v749 = vshll.u32 %v748, 30
    %v750 = vsub.s32 %v746, %v749
    %vm751 = vcmp.lt.s32.totalorder %v750, 0
    %v752 = vsub.s32 0, %v750
    %v753 = vsel %vm751, %v752, %v750
    %v754 = vclz %v753
    %v755 = vsub.s32 %v754, 2
    %vm756 = vcmp.gt.s32.totalorder 0, %v755
    %v757 = vsel %vm756, 0, %v755
    %v758 = vsub.s32 32, %v757
    %v759 = vshll.u32 %v750, %v757
    %v760 = vshrl.u32 %v742, %v758
    %v761 = vor.u32 %v759, %v760
    %v762 = vsub.s32 4294967266, %v757
    %v763 = vadd.s32 %v762, 127
    %v764 = vshll.u32 %v763, 23
    %v765 = vor.u32 4788187, %v764
    %v766 = vand.u32 2147483647, %v765
    %v768 = vcvt.s32.f32 %v761
    %v769 = vmul.f32 %v768, %v766
    %v770 = vxor.u32 %v769, 2147483648
    %v771 = vsel %vm688, %v770, %v769
    %v772 = vsub.s32 4, %v748
    %v773 = vsel %vm688, %v772, %v748
    %v774 = vsel %vm687, %v64, %v771
    %v775 = vsel %vm687, 0, %v773
    %v776 = vcosq.f32.pop %v774
    %v777 = vsinq.f32.pop %v774
    %vm778 = vweird.f32 %v64
    %v779 = vadd.s32 %v775, 3
    %v780 = vand.u32 %v779, 3
    %vm781 = vcmp.lt.s32.totalorder %v780, 2
    %vm782 = vcmp.eq.s32.totalorder %v780, 0
    %v783 = vxor.u32 %v777, 2147483648
    %v784 = vsel %vm782, %v776, %v783
    %vm785 = vcmp.eq.s32.totalorder %v780, 2
    %v786 = vxor.u32 %v776, 2147483648
    %v787 = vsel %vm785, %v786, %v777
    %v788 = vsel %vm781, %v784, %v787
    %v789 = vsel %vm778, nan, %v788
    %v790 = vand.u32 2147483647, %v65
    %vm791 = vcmp.le.f32.partialorder %v790, 0.7853982
    %vm792 = vcmp.lt.s32.totalorder %v65, 0
    %v793 = vand.u32 %v65, 2139095040
    %v794 = vshrl.u32 %v793, 23
    %v795 = vsub.s32 %v794, 127
    %v796 = vand.u32 2147483647, %v65
    %v797 = vand.u32 %v796, 8388607
    %v798 = vor.u32 %v797, 8388608
    %v799 = vsub.s32 0, %v798
    %v800 = vadd.s32 %v795, 1
    %vm801 = vcmp.gt.s32.totalorder %v800, 0
    %v802 = vsel %vm801, %v800, 0
    %v803 = vshrl.u32 %v802, 5
    %v804 = vand.u32 %v802, 31
    %v805 = vsub.s32 32, %v804
    %v806 = vshrl.u32 683565275, %v805
    %v807 = vshll.u32 683565275, %v804
    %v808 = vshrl.u32 2475754826, %v805
    %v809 = vor.u32 %v807, %v808
    %v810 = vshll.u32 2475754826, %v804
    %v811 = vshrl.u32 2131351028, %v805
    %v812 = vor.u32 %v810, %v811
    %v813 = vshll.u32 2131351028, %v804
    %v814 = vshrl.u32 2102212464, %v805
    %v815 = vor.u32 %v813, %v814
    %v816 = vshll.u32 2102212464, %v804
    %v817 = vshrl.u32 920167782, %v805
    %v818 = vor.u32 %v816, %v817
    %v819 = vshll.u32 920167782, %v804
    %v820 = vshrl.u32 1326507024, %v805
    %v821 = vor.u32 %v819, %v820
    %vm822 = vcmp.lt.s32.totalorder %v803, 1
    %vm823 = vcmp.lt.s32.totalorder %v803, 2
    %vm824 = vcmp.lt.s32.totalorder %v803, 3
    %vm825 = vcmp.lt.s32.totalorder %v803, 4
    %v826 = vsel %vm822, %v806, %v809
    %v827 = vsel %vm825, %v815, 2102212464
    %v828 = vsel %vm824, %v812, %v827
    %v829 = vsel %vm823, %v826, %v828
    %v830 = vsel %vm822, %v809, %v812
    %v831 = vsel %vm825, %v818, 920167782
    %v832 = vsel %vm824, %v815, %v831
    %v833 = vsel %vm823, %v830, %v832
    %v834 = vsel %vm822, %v812, %v815
    %v835 = vsel %vm825, %v821, 1326507024
    %v836 = vsel %vm824, %v818, %v835
    %v837 = vsel %vm823, %v834, %v836
    %v838 = vshll.u32 %v798, 8
    %v839 = vmul.u32.u64.compose %v838, %v837
    %v840 = vextract.low.u32 %v839
    %v841 = vextract.high.u32 %v839
    %v842 = vmul.u32.u64.compose %v838, %v833
    %v843 = vextract.low.u32 %v842
    %v844 = vextract.high.u32 %v842
    %v845 = vmul.u32 %v838, %v829
    %v846 = vadd.s32 %v841, %v843
    %vm847 = vc.u32 %v841, %v843
    %v848 = vadd.s32 %v844, 1
    %v849 = vsel %vm847, %v848, %v844
    %v850 = vadd.s32 %v845, %v849
    %v851 = vadd.s32 %v850, 536870912
    %v852 = vshrl.u32 %v851, 30
    %v853 = vshll.u32 %v852, 30
    %v854 = vsub.s32 %v850, %v853
    %vm855 = vcmp.lt.s32.totalorder %v854, 0
    %v856 = vsub.s32 0, %v854
    %v857 = vsel %vm855, %v856, %v854
    %v858 = vclz %v857
    %v859 = vsub.s32 %v858, 2
    %vm860 = vcmp.gt.s32.totalorder 0, %v859
    %v861 = vsel %vm860, 0, %v859
    %v862 = vsub.s32 32, %v861
    %v863 = vshll.u32 %v854, %v861
    %v864 = vshrl.u32 %v846, %v862
    %v865 = vor.u32 %v863, %v864
    %v866 = vsub.s32 4294967266, %v861
    %v867 = vadd.s32 %v866, 127
    %v868 = vshll.u32 %v867, 23
    %v869 = vor.u32 4788187, %v868
    %v870 = vand.u32 2147483647, %v869
    %v872 = vcvt.s32.f32 %v865
    %v873 = vmul.f32 %v872, %v870
    %v874 = vxor.u32 %v873, 2147483648
    %v875 = vsel %vm792, %v874, %v873
    %v876 = vsub.s32 4, %v852
    %v877 = vsel %vm792, %v876, %v852
    %v878 = vsel %vm791, %v65, %v875
    %v879 = vsel %vm791, 0, %v877
    %v880 = vcosq.f32.pop %v878
    %v881 = vsinq.f32.pop %v878
    %vm882 = vweird.f32 %v65
    %v883 = vadd.s32 %v879, 3
    %v884 = vand.u32 %v883, 3
    %vm885 = vcmp.lt.s32.totalorder %v884, 2
    %vm886 = vcmp.eq.s32.totalorder %v884, 0
    %v887 = vxor.u32 %v881, 2147483648
    %v888 = vsel %vm886, %v880, %v887
    %vm889 = vcmp.eq.s32.totalorder %v884, 2
    %v890 = vxor.u32 %v880, 2147483648
    %v891 = vsel %vm889, %v890, %v881
    %v892 = vsel %vm885, %v888, %v891
    %v893 = vsel %vm882, nan, %v892
    %898 = vrot.lane.b32.xlu0 %v168, 16
    %v899 = vpop.permute.xlu0 %898
    %900 = vrot.lane.b32.xlu0 %v271, 16
    %v901 = vpop.permute.xlu0 %900
    %902 = vrot.lane.b32.xlu0 %v374, 16
    %v903 = vpop.permute.xlu0 %902
    %904 = vrot.lane.b32.xlu0 %v477, 16
    %v905 = vpop.permute.xlu0 %904
    %910 = vrot.lane.b32.xlu0 %v168, 32
    %v911 = vpop.permute.xlu0 %910
    %912 = vrot.lane.b32.xlu0 %v271, 32
    %v913 = vpop.permute.xlu0 %912
    %914 = vrot.lane.b32.xlu0 %v374, 32
    %v915 = vpop.permute.xlu0 %914
    %916 = vrot.lane.b32.xlu0 %v477, 32
    %v917 = vpop.permute.xlu0 %916
    %922 = vrot.lane.b32.xlu0 %v168, 48
    %v923 = vpop.permute.xlu0 %922
    %924 = vrot.lane.b32.xlu0 %v271, 48
    %v925 = vpop.permute.xlu0 %924
    %926 = vrot.lane.b32.xlu0 %v374, 48
    %v927 = vpop.permute.xlu0 %926
    %928 = vrot.lane.b32.xlu0 %v477, 48
    %v929 = vpop.permute.xlu0 %928
    %934 = vrot.lane.b32.xlu0 %v168, 64
    %v935 = vpop.permute.xlu0 %934
    %936 = vrot.lane.b32.xlu0 %v271, 64
    %v937 = vpop.permute.xlu0 %936
    %938 = vrot.lane.b32.xlu0 %v374, 64
    %v939 = vpop.permute.xlu0 %938
    %940 = vrot.lane.b32.xlu0 %v477, 64
    %v941 = vpop.permute.xlu0 %940
    %946 = vrot.lane.b32.xlu0 %v168, 80
    %v947 = vpop.permute.xlu0 %946
    %948 = vrot.lane.b32.xlu0 %v271, 80
    %v949 = vpop.permute.xlu0 %948
    %950 = vrot.lane.b32.xlu0 %v374, 80
    %v951 = vpop.permute.xlu0 %950
    %952 = vrot.lane.b32.xlu0 %v477, 80
    %v953 = vpop.permute.xlu0 %952
    %958 = vrot.lane.b32.xlu0 %v168, 96
    %v959 = vpop.permute.xlu0 %958
    %960 = vrot.lane.b32.xlu0 %v271, 96
    %v961 = vpop.permute.xlu0 %960
    %962 = vrot.lane.b32.xlu0 %v374, 96
    %v963 = vpop.permute.xlu0 %962
    %964 = vrot.lane.b32.xlu0 %v477, 96
    %v965 = vpop.permute.xlu0 %964
    %970 = vrot.lane.b32.xlu0 %v168, 112
    %v971 = vpop.permute.xlu0 %970
    %972 = vrot.lane.b32.xlu0 %v271, 112
    %v973 = vpop.permute.xlu0 %972
    %974 = vrot.lane.b32.xlu0 %v374, 112
    %v975 = vpop.permute.xlu0 %974
    %976 = vrot.lane.b32.xlu0 %v477, 112
    %v977 = vpop.permute.xlu0 %976
    %vm982 = vcmask 130048
    %v983 = vsel %vm982, %v168, %v899
    %v984 = vsel %vm982, %v271, %v901
    %v985 = vsel %vm982, %v374, %v903
    %v986 = vsel %vm982, %v477, %v905
    %vm987 = vcmask 261120
    %v988 = vsel %vm987, %v983, %v899
    %v989 = vsel %vm987, %v984, %v901
    %v990 = vsel %vm987, %v985, %v903
    %v991 = vsel %vm987, %v986, %v905
    %vm992 = vcmask 392192
    %v993 = vsel %vm992, %v988, %v911
    %v994 = vsel %vm992, %v989, %v913
    %v995 = vsel %vm992, %v990, %v915
    %v996 = vsel %vm992, %v991, %v917
    %vm997 = vcmask 523264
    %v998 = vsel %vm997, %v993, %v911
    %v999 = vsel %vm997, %v994, %v913
    %v1000 = vsel %vm997, %v995, %v915
    %v1001 = vsel %vm997, %v996, %v917
    %vm1002 = vcmask 654336
    %v1003 = vsel %vm1002, %v998, %v923
    %v1004 = vsel %vm1002, %v999, %v925
    %v1005 = vsel %vm1002, %v1000, %v927
    %v1006 = vsel %vm1002, %v1001, %v929
    %vm1007 = vcmask 785408
    %v1008 = vsel %vm1007, %v1003, %v923
    %v1009 = vsel %vm1007, %v1004, %v925
    %v1010 = vsel %vm1007, %v1005, %v927
    %v1011 = vsel %vm1007, %v1006, %v929
    %vm1012 = vcmask 916480
    %v1013 = vsel %vm1012, %v1008, %v935
    %v1014 = vsel %vm1012, %v1009, %v937
    %v1015 = vsel %vm1012, %v1010, %v939
    %v1016 = vsel %vm1012, %v1011, %v941
    %v1017 = vsel %vm982, %v935, %v947
    %v1018 = vsel %vm982, %v937, %v949
    %v1019 = vsel %vm982, %v939, %v951
    %v1020 = vsel %vm982, %v941, %v953
    %v1021 = vsel %vm987, %v1017, %v947
    %v1022 = vsel %vm987, %v1018, %v949
    %v1023 = vsel %vm987, %v1019, %v951
    %v1024 = vsel %vm987, %v1020, %v953
    %v1025 = vsel %vm992, %v1021, %v959
    %v1026 = vsel %vm992, %v1022, %v961
    %v1027 = vsel %vm992, %v1023, %v963
    %v1028 = vsel %vm992, %v1024, %v965
    %v1029 = vsel %vm997, %v1025, %v959
    %v1030 = vsel %vm997, %v1026, %v961
    %v1031 = vsel %vm997, %v1027, %v963
    %v1032 = vsel %vm997, %v1028, %v965
    %v1033 = vsel %vm1002, %v1029, %v971
    %v1034 = vsel %vm1002, %v1030, %v973
    %v1035 = vsel %vm1002, %v1031, %v975
    %v1036 = vsel %vm1002, %v1032, %v977
    %v1037 = vsel %vm1007, %v1033, %v971
    %v1038 = vsel %vm1007, %v1034, %v973
    %v1039 = vsel %vm1007, %v1035, %v975
    %v1040 = vsel %vm1007, %v1036, %v977
    %v1041 = vsel %vm1012, %v1037, %v168
    %v1042 = vsel %vm1012, %v1038, %v271
    %v1043 = vsel %vm1012, %v1039, %v374
    %v1044 = vsel %vm1012, %v1040, %v477
    %1045 = vst [vmem:[%s2] sm:$0xff] %v1013
    %1046 = vst [vmem:[%s2 + $0x8] sm:$0xff] %v1041
    %1047 = vst [vmem:[%s2 + $0x10] sm:$0xff] %v1014
    %1048 = vst [vmem:[%s2 + $0x18] sm:$0xff] %v1042
    %1049 = vst [vmem:[%s2 + $0x20] sm:$0xff] %v1015
    %1050 = vst [vmem:[%s2 + $0x28] sm:$0xff] %v1043
    %1051 = vst [vmem:[%s2 + $0x30] sm:$0xff] %v1016
    %1052 = vst [vmem:[%s2 + $0x38] sm:$0xff] %v1044
    %1057 = vrot.lane.b32.xlu0 %v581, 16
    %v1058 = vpop.permute.xlu0 %1057
    %1059 = vrot.lane.b32.xlu0 %v685, 16
    %v1060 = vpop.permute.xlu0 %1059
    %1061 = vrot.lane.b32.xlu0 %v789, 16
    %v1062 = vpop.permute.xlu0 %1061
    %1063 = vrot.lane.b32.xlu0 %v893, 16
    %v1064 = vpop.permute.xlu0 %1063
    %1069 = vrot.lane.b32.xlu0 %v581, 32
    %v1070 = vpop.permute.xlu0 %1069
    %1071 = vrot.lane.b32.xlu0 %v685, 32
    %v1072 = vpop.permute.xlu0 %1071
    %1073 = vrot.lane.b32.xlu0 %v789, 32
    %v1074 = vpop.permute.xlu0 %1073
    %1075 = vrot.lane.b32.xlu0 %v893, 32
    %v1076 = vpop.permute.xlu0 %1075
    %1081 = vrot.lane.b32.xlu0 %v581, 48
    %v1082 = vpop.permute.xlu0 %1081
    %1083 = vrot.lane.b32.xlu0 %v685, 48
    %v1084 = vpop.permute.xlu0 %1083
    %1085 = vrot.lane.b32.xlu0 %v789, 48
    %v1086 = vpop.permute.xlu0 %1085
    %1087 = vrot.lane.b32.xlu0 %v893, 48
    %v1088 = vpop.permute.xlu0 %1087
    %1093 = vrot.lane.b32.xlu0 %v581, 64
    %v1094 = vpop.permute.xlu0 %1093
    %1095 = vrot.lane.b32.xlu0 %v685, 64
    %v1096 = vpop.permute.xlu0 %1095
    %1097 = vrot.lane.b32.xlu0 %v789, 64
    %v1098 = vpop.permute.xlu0 %1097
    %1099 = vrot.lane.b32.xlu0 %v893, 64
    %v1100 = vpop.permute.xlu0 %1099
    %1105 = vrot.lane.b32.xlu0 %v581, 80
    %v1106 = vpop.permute.xlu0 %1105
    %1107 = vrot.lane.b32.xlu0 %v685, 80
    %v1108 = vpop.permute.xlu0 %1107
    %1109 = vrot.lane.b32.xlu0 %v789, 80
    %v1110 = vpop.permute.xlu0 %1109
    %1111 = vrot.lane.b32.xlu0 %v893, 80
    %v1112 = vpop.permute.xlu0 %1111
    %1117 = vrot.lane.b32.xlu0 %v581, 96
    %v1118 = vpop.permute.xlu0 %1117
    %1119 = vrot.lane.b32.xlu0 %v685, 96
    %v1120 = vpop.permute.xlu0 %1119
    %1121 = vrot.lane.b32.xlu0 %v789, 96
    %v1122 = vpop.permute.xlu0 %1121
    %1123 = vrot.lane.b32.xlu0 %v893, 96
    %v1124 = vpop.permute.xlu0 %1123
    %1129 = vrot.lane.b32.xlu0 %v581, 112
    %v1130 = vpop.permute.xlu0 %1129
    %1131 = vrot.lane.b32.xlu0 %v685, 112
    %v1132 = vpop.permute.xlu0 %1131
    %1133 = vrot.lane.b32.xlu0 %v789, 112
    %v1134 = vpop.permute.xlu0 %1133
    %1135 = vrot.lane.b32.xlu0 %v893, 112
    %v1136 = vpop.permute.xlu0 %1135
    %v1141 = vsel %vm982, %v581, %v1058
    %v1142 = vsel %vm982, %v685, %v1060
    %v1143 = vsel %vm982, %v789, %v1062
    %v1144 = vsel %vm982, %v893, %v1064
    %v1145 = vsel %vm987, %v1141, %v1058
    %v1146 = vsel %vm987, %v1142, %v1060
    %v1147 = vsel %vm987, %v1143, %v1062
    %v1148 = vsel %vm987, %v1144, %v1064
    %v1149 = vsel %vm992, %v1145, %v1070
    %v1150 = vsel %vm992, %v1146, %v1072
    %v1151 = vsel %vm992, %v1147, %v1074
    %v1152 = vsel %vm992, %v1148, %v1076
    %v1153 = vsel %vm997, %v1149, %v1070
    %v1154 = vsel %vm997, %v1150, %v1072
    %v1155 = vsel %vm997, %v1151, %v1074
    %v1156 = vsel %vm997, %v1152, %v1076
    %v1157 = vsel %vm1002, %v1153, %v1082
    %v1158 = vsel %vm1002, %v1154, %v1084
    %v1159 = vsel %vm1002, %v1155, %v1086
    %v1160 = vsel %vm1002, %v1156, %v1088
    %v1161 = vsel %vm1007, %v1157, %v1082
    %v1162 = vsel %vm1007, %v1158, %v1084
    %v1163 = vsel %vm1007, %v1159, %v1086
    %v1164 = vsel %vm1007, %v1160, %v1088
    %v1165 = vsel %vm1012, %v1161, %v1094
    %v1166 = vsel %vm1012, %v1162, %v1096
    %v1167 = vsel %vm1012, %v1163, %v1098
    %v1168 = vsel %vm1012, %v1164, %v1100
    %v1169 = vsel %vm982, %v1094, %v1106
    %v1170 = vsel %vm982, %v1096, %v1108
    %v1171 = vsel %vm982, %v1098, %v1110
    %v1172 = vsel %vm982, %v1100, %v1112
    %v1173 = vsel %vm987, %v1169, %v1106
    %v1174 = vsel %vm987, %v1170, %v1108
    %v1175 = vsel %vm987, %v1171, %v1110
    %v1176 = vsel %vm987, %v1172, %v1112
    %v1177 = vsel %vm992, %v1173, %v1118
    %v1178 = vsel %vm992, %v1174, %v1120
    %v1179 = vsel %vm992, %v1175, %v1122
    %v1180 = vsel %vm992, %v1176, %v1124
    %v1181 = vsel %vm997, %v1177, %v1118
    %v1182 = vsel %vm997, %v1178, %v1120
    %v1183 = vsel %vm997, %v1179, %v1122
    %v1184 = vsel %vm997, %v1180, %v1124
    %v1185 = vsel %vm1002, %v1181, %v1130
    %v1186 = vsel %vm1002, %v1182, %v1132
    %v1187 = vsel %vm1002, %v1183, %v1134
    %v1188 = vsel %vm1002, %v1184, %v1136
    %v1189 = vsel %vm1007, %v1185, %v1130
    %v1190 = vsel %vm1007, %v1186, %v1132
    %v1191 = vsel %vm1007, %v1187, %v1134
    %v1192 = vsel %vm1007, %v1188, %v1136
    %v1193 = vsel %vm1012, %v1189, %v581
    %v1194 = vsel %vm1012, %v1190, %v685
    %v1195 = vsel %vm1012, %v1191, %v789
    %v1196 = vsel %vm1012, %v1192, %v893
    %1197 = vst [vmem:[%s3] sm:$0xff] %v1165
    %1198 = vst [vmem:[%s3 + $0x8] sm:$0xff] %v1193
    %1199 = vst [vmem:[%s3 + $0x10] sm:$0xff] %v1166
    %1200 = vst [vmem:[%s3 + $0x18] sm:$0xff] %v1194
    %1201 = vst [vmem:[%s3 + $0x20] sm:$0xff] %v1167
    %1202 = vst [vmem:[%s3 + $0x28] sm:$0xff] %v1195
    %1203 = vst [vmem:[%s3 + $0x30] sm:$0xff] %v1168
    %1204 = vst [vmem:[%s3 + $0x38] sm:$0xff] %v1196
    // Predicated region
    $region14: #{_build_cache.1} parent=1 // pred_check
      _
    $region15: #{_build_cache.1} parent=1 // pred_check_branch
      %1206 = sbr.rel (0) target = $region17
    $region16: #{_build_cache.1} parent=1 // pred_region
      _
    $region17: #{_build_cache.1} parent=1 // pred_fallthru
      _
    // Predicated region
    $region18: #{_build_cache.1} parent=1 // pred_check
      _
    $region19: #{_build_cache.1} parent=1 // pred_check_branch
      %1208 = sbr.rel (0) target = $region21
    $region20: #{_build_cache.1} parent=1 // pred_region
      _
    $region21: #{_build_cache.1} parent=1 // pred_fallthru
      _
    // Predicated region
    $region22: #{_build_cache.1} parent=1 // pred_check
      _
    $region23: #{_build_cache.1} parent=1 // pred_check_branch
      %1210 = sbr.rel (0) target = $region25
    $region24: #{_build_cache.1} parent=1 // pred_region
      _
    $region25: #{_build_cache.1} parent=1 // pred_fallthru
      _
    // Predicated region
    $region26: #{_build_cache.1} parent=1 // pred_check
      _
    $region27: #{_build_cache.1} parent=1 // pred_check_branch
      %1212 = sbr.rel (0) target = $region29
    $region28: #{_build_cache.1} parent=1 // pred_region
      _
    $region29: #{_build_cache.1} parent=1 // pred_fallthru
      _
    %1213 = vsyncpa [#allocation3], 1

</llo_original>
